<compile_context>
chip_gen: v5e
topology: v5e:2x2
jax: 0.10.0
libtpu: 0.0.40
codegen_flags: <defaults>
</compile_context>

<pallas_src>
import jax
import jax.numpy as jnp
from jax.experimental import pallas as pl
from jax.experimental.pallas import tpu as pltpu

STEPS = (11, 11, 2, 2, 2)                               # AMTLoss.steps
NUM_TASKS = len(STEPS)
STARTS = tuple(int(sum(STEPS[:i])) for i in range(NUM_TASKS))   # (0, 11, 22, 24, 26)
WIDTHS = tuple(s + 1 for s in STEPS)                            # (12, 12, 3, 3, 3)
PRED_WIDTH = sum(STEPS) + 1                              # 29 logit columns consumed
LANES = 128
EXP_GROUPS = ((0, 2, 4), (1, 3))                         # disjoint windows share one exp()
NEG_BIG = -1e30                                          # plain Python float (no capture)


# ---------------------------------------------------------------------------
# Pallas kernel: fused 5-task masked cross-entropy, accumulated over batch tiles
# ---------------------------------------------------------------------------
def _amt_loss_kernel(nrows_ref, pred_ref, lab_ref, sum_ref, cnt_ref):
    """
    nrows_ref : SMEM (1,)   i32  actual batch size B (for ragged last tile masking)
    pred_ref  : VMEM (tb,29) f32 logits tile
    lab_ref   : VMEM (tb,5)  i32 labels tile (-1 = masked)
    sum_ref   : VMEM (1,128) f32 per-task loss sums   (lane i = task i), grid-resident
    cnt_ref   : VMEM (1,128) f32 per-task valid counts (lane i = task i), grid-resident
    """
    @pl.when(pl.program_id(0) == 0)
    def _():
        sum_ref[...] = jnp.zeros_like(sum_ref)
        cnt_ref[...] = jnp.zeros_like(cnt_ref)

    preds = pred_ref[...]                                    # (tb, 29) f32
    labs = lab_ref[...]                                      # (tb, 5)  i32
    tb = preds.shape[0]

    # Row validity for the ragged last tile (rows >= B contain undefined data).
    row = jax.lax.broadcasted_iota(jnp.int32, (tb, 1), 0)
    row_ok = (pl.program_id(0) * tb + row) < nrows_ref[0]    # (tb, 1) bool

    lane = jax.lax.broadcasted_iota(jnp.int32, preds.shape, 1)   # (tb, 29)
    lane1 = jax.lax.broadcasted_iota(jnp.int32, (1, LANES), 1)   # (1, 128)

    # Per-task column-window masks and row maxes (per-task stabilization).
    col_masks, row_maxes = [], []
    for i in range(NUM_TASKS):
        cm = (lane >= STARTS[i]) & (lane < STARTS[i] + WIDTHS[i])
        col_masks.append(cm)
        row_maxes.append(jnp.max(jnp.where(cm, preds, NEG_BIG), axis=-1, keepdims=True))

    # One exp() plane per group of pairwise-disjoint windows (2 exps instead of 5).
    exp_planes = [None] * NUM_TASKS
    for group in EXP_GROUPS:
        max_plane = jnp.zeros_like(preds)
        union = jnp.zeros(preds.shape, jnp.bool_)
        for i in group:
            max_plane = jnp.where(col_masks[i], row_maxes[i], max_plane)
            union = union | col_masks[i]
        e = jnp.exp(jnp.where(union, preds - max_plane, NEG_BIG))
        for i in group:
            exp_planes[i] = e

    tile_sum = jnp.zeros((1, LANES), jnp.float32)
    tile_cnt = jnp.zeros((1, LANES), jnp.float32)
    for i in range(NUM_TASKS):                               # static 5-iteration loop
        lab_i = labs[:, i:i + 1]                             # (tb, 1) i32
        valid = (lab_i != -1) & row_ok                       # (tb, 1) bool

        # softmax denominator over this task's window (exp shared within the group)
        denom = jnp.sum(jnp.where(col_masks[i], exp_planes[i], 0.0),
                        axis=-1, keepdims=True)              # (tb, 1) >= 1 for valid rows
        lse = row_maxes[i] + jnp.log(denom)                  # (tb, 1)

        # target logit via one-hot lane mask (no gather)
        tgt_mask = col_masks[i] & (lane == (STARTS[i] + lab_i))
        tgt = jnp.sum(jnp.where(tgt_mask, preds, 0.0), axis=-1, keepdims=True)

        per = jnp.where(valid, lse - tgt, 0.0)               # masked per-sample CE
        s = jnp.sum(per, axis=0, keepdims=True)              # (1, 1)
        c = jnp.sum(valid.astype(jnp.float32), axis=0, keepdims=True)
        tile_sum = tile_sum + jnp.where(lane1 == i, s, 0.0)
        tile_cnt = tile_cnt + jnp.where(lane1 == i, c, 0.0)

    sum_ref[...] += tile_sum
    cnt_ref[...] += tile_cnt


# ---------------------------------------------------------------------------
# Wrapper: tiling over the batch, pallas_call, scalar finalize in plain JAX
# ---------------------------------------------------------------------------
def amt_loss(predicts, labels, *, batch_tile=1024):
    predicts = jnp.asarray(predicts, jnp.float32)
    labels = jnp.asarray(labels)
    if labels.ndim == 3:                       # PyTorch: labels.squeeze(1)
        labels = labels[:, 0, :]
    labels = labels.astype(jnp.int32)

    B, P = predicts.shape
    assert P >= PRED_WIDTH, (P, PRED_WIDTH)
    if P > PRED_WIDTH:                         # module only ever reads the first 29 columns
        predicts = predicts[:, :PRED_WIDTH]
    assert labels.shape == (B, NUM_TASKS)

    if B <= batch_tile:
        tb = B                                 # single tile == full batch (legal block)
    else:
        tb = max(8, (batch_tile // 8) * 8)     # sublane-aligned batch tile
    grid = (pl.cdiv(B, tb),)

    nrows = jnp.array([B], jnp.int32)          # scalar-prefetch: real batch size

    sums, cnts = pl.pallas_call(
        _amt_loss_kernel,
        out_shape=(jax.ShapeDtypeStruct((1, LANES), jnp.float32),
                   jax.ShapeDtypeStruct((1, LANES), jnp.float32)),
        grid_spec=pltpu.PrefetchScalarGridSpec(
            num_scalar_prefetch=1,
            grid=grid,
            in_specs=[pl.BlockSpec((tb, PRED_WIDTH), lambda t, n: (t, 0)),
                      pl.BlockSpec((tb, NUM_TASKS), lambda t, n: (t, 0))],
            out_specs=[pl.BlockSpec((1, LANES), lambda t, n: (0, 0)),
                       pl.BlockSpec((1, LANES), lambda t, n: (0, 0))]),
        compiler_params=pltpu.CompilerParams(
            dimension_semantics=("arbitrary",)),    # batch axis is a reduction here
        cost_estimate=pl.CostEstimate(
            flops=40 * NUM_TASKS * B,
            transcendentals=B * (len(EXP_GROUPS) * PRED_WIDTH + NUM_TASKS),
            bytes_accessed=predicts.size * 4 + labels.size * 4 + 2 * LANES * 4),
    )(nrows, predicts, labels)

    # Finalize (10 scalars) outside the kernel; 0/0 -> NaN matches PyTorch empty-task.
    per_task = sums[0, :NUM_TASKS] / cnts[0, :NUM_TASKS]
    return jnp.sum(per_task)


# ---------------------------------------------------------------------------
# Pure-JAX reference (mirrors the PyTorch forward exactly)
# ---------------------------------------------------------------------------
def amt_loss_reference(predicts, labels):
    predicts = jnp.asarray(predicts, jnp.float32)
    labels = jnp.asarray(labels)
    if labels.ndim == 3:
        labels = labels[:, 0, :]
    labels = labels.astype(jnp.int32)

    cum = jnp.float32(0.0)
    j = 0
    for i, step in enumerate(STEPS):
        width = step + 1
        logits = predicts[:, j:j + width]
        lab = labels[:, i]
        valid = lab != -1
        lse = jax.scipy.special.logsumexp(logits, axis=-1)
        safe_lab = jnp.clip(lab, 0, width - 1)
        tgt = jnp.take_along_axis(logits, safe_lab[:, None], axis=-1)[:, 0]
        per = lse - tgt
        n = jnp.sum(valid.astype(jnp.float32))
        cum = cum + jnp.sum(jnp.where(valid, per, 0.0)) / n
        j += step
    return cum


def _make_inputs(key, B):
    kp, kl, km = jax.random.split(key, 3)
    predicts = jax.random.normal(kp, (B, PRED_WIDTH), jnp.float32)
    cols = []
    for i, step in enumerate(STEPS):
        ki = jax.random.fold_in(kl, i)
        cols.append(jax.random.randint(ki, (B,), 0, step + 1))
    labels2d = jnp.stack(cols, axis=1)
    drop = jax.random.bernoulli(km, 0.3, (B, NUM_TASKS))
    drop = drop.at[0, :].set(False)            # keep >=1 valid sample per task (avoid NaN)
    labels2d = jnp.where(drop, -1, labels2d)
    return predicts, labels2d[:, None, :]      # (B, 1, 5), as fed to the PyTorch module


if __name__ == "__main__":
    key = jax.random.PRNGKey(0)

    # Small-batch case: single tile, block == full array.
    predicts, labels = _make_inputs(jax.random.fold_in(key, 0), 6)
    loss = jax.block_until_ready(amt_loss(predicts, labels))
    ref = amt_loss_reference(predicts, labels)
    assert jnp.isfinite(loss), float(loss)
    assert jnp.allclose(loss, ref, rtol=1e-3, atol=1e-3), (float(loss), float(ref))

    # Multi-tile case with a ragged last tile (exercises grid accumulation + row mask).
    predicts2, labels2 = _make_inputs(jax.random.fold_in(key, 1), 300)
    loss2 = jax.block_until_ready(amt_loss(predicts2, labels2, batch_tile=128))
    ref2 = amt_loss_reference(predicts2, labels2)
    assert jnp.isfinite(loss2), float(loss2)
    assert jnp.allclose(loss2, ref2, rtol=1e-3, atol=1e-3), (float(loss2), float(ref2))

    print("KERNEL_OK")
</pallas_src>

<mosaic_0001>
module attributes {stable_mosaic.version = 11 : i64} {
  func.func @_amt_loss_kernel(%arg0: i32, %arg1: memref<1xi32, #tpu.memory_space<smem>>, %arg2: memref<6x29xf32, #tpu.memory_space<vmem>>, %arg3: memref<6x5xi32, #tpu.memory_space<vmem>>, %arg4: memref<1x128xf32, #tpu.memory_space<vmem>>, %arg5: memref<1x128xf32, #tpu.memory_space<vmem>>) attributes {dimension_semantics = [#tpu.dimension_semantics<arbitrary>], iteration_bounds = array<i64: 1>, scalar_prefetch = 1 : i64, scratch_operands = 0 : i64, tpu.core_type = #tpu.core_type<tc>, window_params = [{transform_indices = @transform_0, window_bounds = array<i64: 6, 29>}, {transform_indices = @transform_1, window_bounds = array<i64: 6, 5>}, {pipeline_mode = #tpu.pipeline_mode<synchronous>, transform_indices = @transform_2, window_bounds = array<i64: 1, 128>}, {pipeline_mode = #tpu.pipeline_mode<synchronous>, transform_indices = @transform_3, window_bounds = array<i64: 1, 128>}]} {
    %c0_i32 = arith.constant 0 : i32
    %0 = arith.cmpi eq, %arg0, %c0_i32 : i32
    %1 = arith.extui %0 : i1 to i32
    %c0_i32_0 = arith.constant 0 : i32
    %2 = arith.cmpi ne, %1, %c0_i32_0 : i32
    scf.if %2 {
      %cst_90 = arith.constant 0.000000e+00 : f32
      %309 = vector.broadcast %cst_90 : f32 to vector<1x128xf32>
      %c0_91 = arith.constant 0 : index
      %c0_92 = arith.constant 0 : index
      %310 = vector.load %arg4[%c0_91, %c0_92] : memref<1x128xf32, #tpu.memory_space<vmem>>, vector<1x128xf32>
      tpu.vector_store %arg4[%c0_91, %c0_92], %309 {strides = array<i32>} : memref<1x128xf32, #tpu.memory_space<vmem>>, vector<1x128xf32>,
      %cst_93 = arith.constant 0.000000e+00 : f32
      %311 = vector.broadcast %cst_93 : f32 to vector<1x128xf32>
      %c0_94 = arith.constant 0 : index
      %c0_95 = arith.constant 0 : index
      %312 = vector.load %arg5[%c0_94, %c0_95] : memref<1x128xf32, #tpu.memory_space<vmem>>, vector<1x128xf32>
      tpu.vector_store %arg5[%c0_94, %c0_95], %311 {strides = array<i32>} : memref<1x128xf32, #tpu.memory_space<vmem>>, vector<1x128xf32>,
    } else {
    }
    %c0 = arith.constant 0 : index
    %c0_1 = arith.constant 0 : index
    %3 = vector.load %arg2[%c0, %c0_1] : memref<6x29xf32, #tpu.memory_space<vmem>>, vector<6x29xf32>
    %c0_2 = arith.constant 0 : index
    %c0_3 = arith.constant 0 : index
    %4 = vector.load %arg3[%c0_2, %c0_3] : memref<6x5xi32, #tpu.memory_space<vmem>>, vector<6x5xi32>
    %5 = tpu.iota {dimensions = array<i32: 0>} : vector<6x1xi32>
    %c6_i32 = arith.constant 6 : i32
    %6 = arith.muli %arg0, %c6_i32 : i32
    %7 = vector.broadcast %6 : i32 to vector<6x1xi32>
    %8 = arith.addi %7, %5 : vector<6x1xi32>
    %c0_4 = arith.constant 0 : index
    %9 = memref.load %arg1[%c0_4] : memref<1xi32, #tpu.memory_space<smem>>
    %10 = vector.broadcast %9 : i32 to vector<6x1xi32>
    %11 = arith.cmpi slt, %8, %10 : vector<6x1xi32>
    %12 = tpu.iota {dimensions = array<i32: 1>} : vector<6x29xi32>
    %13 = tpu.iota {dimensions = array<i32: 1>} : vector<1x128xi32>
    %c0_i32_5 = arith.constant 0 : i32
    %14 = vector.broadcast %c0_i32_5 : i32 to vector<6x29xi32>
    %15 = arith.cmpi sge, %12, %14 : vector<6x29xi32>
    %c12_i32 = arith.constant 12 : i32
    %16 = vector.broadcast %c12_i32 : i32 to vector<6x29xi32>
    %17 = arith.cmpi slt, %12, %16 : vector<6x29xi32>
    %18 = arith.andi %15, %17 : vector<6x29xi1>
    %cst = arith.constant -1.000000e+30 : f32
    %19 = vector.broadcast %cst : f32 to vector<6x29xf32>
    %20 = arith.select %18, %3, %19 : vector<6x29xi1>, vector<6x29xf32>
    %cst_6 = arith.constant dense<0xFF800000> : vector<6xf32>
    %21 = vector.multi_reduction <maximumf>, %20, %cst_6 [1] : vector<6x29xf32> to vector<6xf32>
    %22 = vector.shape_cast %21 : vector<6xf32> to vector<6x1xf32>
    %c11_i32 = arith.constant 11 : i32
    %23 = vector.broadcast %c11_i32 : i32 to vector<6x29xi32>
    %24 = arith.cmpi sge, %12, %23 : vector<6x29xi32>
    %c23_i32 = arith.constant 23 : i32
    %25 = vector.broadcast %c23_i32 : i32 to vector<6x29xi32>
    %26 = arith.cmpi slt, %12, %25 : vector<6x29xi32>
    %27 = arith.andi %24, %26 : vector<6x29xi1>
    %cst_7 = arith.constant -1.000000e+30 : f32
    %28 = vector.broadcast %cst_7 : f32 to vector<6x29xf32>
    %29 = arith.select %27, %3, %28 : vector<6x29xi1>, vector<6x29xf32>
    %cst_8 = arith.constant dense<0xFF800000> : vector<6xf32>
    %30 = vector.multi_reduction <maximumf>, %29, %cst_8 [1] : vector<6x29xf32> to vector<6xf32>
    %31 = vector.shape_cast %30 : vector<6xf32> to vector<6x1xf32>
    %c22_i32 = arith.constant 22 : i32
    %32 = vector.broadcast %c22_i32 : i32 to vector<6x29xi32>
    %33 = arith.cmpi sge, %12, %32 : vector<6x29xi32>
    %c25_i32 = arith.constant 25 : i32
    %34 = vector.broadcast %c25_i32 : i32 to vector<6x29xi32>
    %35 = arith.cmpi slt, %12, %34 : vector<6x29xi32>
    %36 = arith.andi %33, %35 : vector<6x29xi1>
    %cst_9 = arith.constant -1.000000e+30 : f32
    %37 = vector.broadcast %cst_9 : f32 to vector<6x29xf32>
    %38 = arith.select %36, %3, %37 : vector<6x29xi1>, vector<6x29xf32>
    %cst_10 = arith.constant dense<0xFF800000> : vector<6xf32>
    %39 = vector.multi_reduction <maximumf>, %38, %cst_10 [1] : vector<6x29xf32> to vector<6xf32>
    %40 = vector.shape_cast %39 : vector<6xf32> to vector<6x1xf32>
    %c24_i32 = arith.constant 24 : i32
    %41 = vector.broadcast %c24_i32 : i32 to vector<6x29xi32>
    %42 = arith.cmpi sge, %12, %41 : vector<6x29xi32>
    %c27_i32 = arith.constant 27 : i32
    %43 = vector.broadcast %c27_i32 : i32 to vector<6x29xi32>
    %44 = arith.cmpi slt, %12, %43 : vector<6x29xi32>
    %45 = arith.andi %42, %44 : vector<6x29xi1>
    %cst_11 = arith.constant -1.000000e+30 : f32
    %46 = vector.broadcast %cst_11 : f32 to vector<6x29xf32>
    %47 = arith.select %45, %3, %46 : vector<6x29xi1>, vector<6x29xf32>
    %cst_12 = arith.constant dense<0xFF800000> : vector<6xf32>
    %48 = vector.multi_reduction <maximumf>, %47, %cst_12 [1] : vector<6x29xf32> to vector<6xf32>
    %49 = vector.shape_cast %48 : vector<6xf32> to vector<6x1xf32>
    %c26_i32 = arith.constant 26 : i32
    %50 = vector.broadcast %c26_i32 : i32 to vector<6x29xi32>
    %51 = arith.cmpi sge, %12, %50 : vector<6x29xi32>
    %c29_i32 = arith.constant 29 : i32
    %52 = vector.broadcast %c29_i32 : i32 to vector<6x29xi32>
    %53 = arith.cmpi slt, %12, %52 : vector<6x29xi32>
    %54 = arith.andi %51, %53 : vector<6x29xi1>
    %cst_13 = arith.constant -1.000000e+30 : f32
    %55 = vector.broadcast %cst_13 : f32 to vector<6x29xf32>
    %56 = arith.select %54, %3, %55 : vector<6x29xi1>, vector<6x29xf32>
    %cst_14 = arith.constant dense<0xFF800000> : vector<6xf32>
    %57 = vector.multi_reduction <maximumf>, %56, %cst_14 [1] : vector<6x29xf32> to vector<6xf32>
    %58 = vector.shape_cast %57 : vector<6xf32> to vector<6x1xf32>
    %cst_15 = arith.constant 0.000000e+00 : f32
    %59 = vector.broadcast %cst_15 : f32 to vector<6x29xf32>
    %false = arith.constant false
    %60 = vector.broadcast %false : i1 to vector<6x29xi1>
    %61 = vector.shape_cast %22 : vector<6x1xf32> to vector<6x1xf32>
    %62 = vector.broadcast %61 : vector<6x1xf32> to vector<6x29xf32>
    %63 = arith.select %18, %62, %59 : vector<6x29xi1>, vector<6x29xf32>
    %64 = arith.ori %60, %18 : vector<6x29xi1>
    %65 = vector.shape_cast %40 : vector<6x1xf32> to vector<6x1xf32>
    %66 = vector.broadcast %65 : vector<6x1xf32> to vector<6x29xf32>
    %67 = arith.select %36, %66, %63 : vector<6x29xi1>, vector<6x29xf32>
    %68 = arith.ori %64, %36 : vector<6x29xi1>
    %69 = vector.shape_cast %58 : vector<6x1xf32> to vector<6x1xf32>
    %70 = vector.broadcast %69 : vector<6x1xf32> to vector<6x29xf32>
    %71 = arith.select %54, %70, %67 : vector<6x29xi1>, vector<6x29xf32>
    %72 = arith.ori %68, %54 : vector<6x29xi1>
    %73 = arith.subf %3, %71 : vector<6x29xf32>
    %cst_16 = arith.constant -1.000000e+30 : f32
    %74 = vector.broadcast %cst_16 : f32 to vector<6x29xf32>
    %75 = arith.select %72, %73, %74 : vector<6x29xi1>, vector<6x29xf32>
    %76 = math.exp %75 : vector<6x29xf32>
    %cst_17 = arith.constant 0.000000e+00 : f32
    %77 = vector.broadcast %cst_17 : f32 to vector<6x29xf32>
    %false_18 = arith.constant false
    %78 = vector.broadcast %false_18 : i1 to vector<6x29xi1>
    %79 = vector.shape_cast %31 : vector<6x1xf32> to vector<6x1xf32>
    %80 = vector.broadcast %79 : vector<6x1xf32> to vector<6x29xf32>
    %81 = arith.select %27, %80, %77 : vector<6x29xi1>, vector<6x29xf32>
    %82 = arith.ori %78, %27 : vector<6x29xi1>
    %83 = vector.shape_cast %49 : vector<6x1xf32> to vector<6x1xf32>
    %84 = vector.broadcast %83 : vector<6x1xf32> to vector<6x29xf32>
    %85 = arith.select %45, %84, %81 : vector<6x29xi1>, vector<6x29xf32>
    %86 = arith.ori %82, %45 : vector<6x29xi1>
    %87 = arith.subf %3, %85 : vector<6x29xf32>
    %cst_19 = arith.constant -1.000000e+30 : f32
    %88 = vector.broadcast %cst_19 : f32 to vector<6x29xf32>
    %89 = arith.select %86, %87, %88 : vector<6x29xi1>, vector<6x29xf32>
    %90 = math.exp %89 : vector<6x29xf32>
    %cst_20 = arith.constant 0.000000e+00 : f32
    %91 = vector.broadcast %cst_20 : f32 to vector<1x128xf32>
    %cst_21 = arith.constant 0.000000e+00 : f32
    %92 = vector.broadcast %cst_21 : f32 to vector<1x128xf32>
    %93 = vector.extract_strided_slice %4 {offsets = [0, 0], sizes = [6, 1], strides = [1, 1]} : vector<6x5xi32> to vector<6x1xi32>
    %c-1_i32 = arith.constant -1 : i32
    %94 = vector.broadcast %c-1_i32 : i32 to vector<6x1xi32>
    %95 = arith.cmpi ne, %93, %94 : vector<6x1xi32>
    %96 = arith.andi %95, %11 : vector<6x1xi1>
    %cst_22 = arith.constant 0.000000e+00 : f32
    %97 = vector.broadcast %cst_22 : f32 to vector<6x29xf32>
    %98 = arith.select %18, %76, %97 : vector<6x29xi1>, vector<6x29xf32>
    %cst_23 = arith.constant dense<0.000000e+00> : vector<6xf32>
    %99 = vector.multi_reduction <add>, %98, %cst_23 [1] : vector<6x29xf32> to vector<6xf32>
    %100 = vector.shape_cast %99 : vector<6xf32> to vector<6x1xf32>
    %101 = math.log %100 : vector<6x1xf32>
    %102 = arith.addf %22, %101 : vector<6x1xf32>
    %c0_i32_24 = arith.constant 0 : i32
    %103 = vector.broadcast %c0_i32_24 : i32 to vector<6x1xi32>
    %104 = arith.addi %103, %93 : vector<6x1xi32>
    %105 = vector.broadcast %104 : vector<6x1xi32> to vector<6x29xi32>
    %106 = arith.cmpi eq, %12, %105 : vector<6x29xi32>
    %107 = arith.andi %18, %106 : vector<6x29xi1>
    %cst_25 = arith.constant 0.000000e+00 : f32
    %108 = vector.broadcast %cst_25 : f32 to vector<6x29xf32>
    %109 = arith.select %107, %3, %108 : vector<6x29xi1>, vector<6x29xf32>
    %cst_26 = arith.constant dense<0.000000e+00> : vector<6xf32>
    %110 = vector.multi_reduction <add>, %109, %cst_26 [1] : vector<6x29xf32> to vector<6xf32>
    %111 = vector.shape_cast %110 : vector<6xf32> to vector<6x1xf32>
    %112 = arith.subf %102, %111 : vector<6x1xf32>
    %cst_27 = arith.constant 0.000000e+00 : f32
    %113 = vector.broadcast %cst_27 : f32 to vector<6x1xf32>
    %114 = arith.select %96, %112, %113 : vector<6x1xi1>, vector<6x1xf32>
    %cst_28 = arith.constant dense<0.000000e+00> : vector<1xf32>
    %115 = vector.multi_reduction <add>, %114, %cst_28 [0] : vector<6x1xf32> to vector<1xf32>
    %116 = vector.shape_cast %115 : vector<1xf32> to vector<1x1xf32>
    %117 = arith.extui %96 : vector<6x1xi1> to vector<6x1xi32>
    %118 = arith.sitofp %117 : vector<6x1xi32> to vector<6x1xf32>
    %cst_29 = arith.constant dense<0.000000e+00> : vector<1xf32>
    %119 = vector.multi_reduction <add>, %118, %cst_29 [0] : vector<6x1xf32> to vector<1xf32>
    %120 = vector.shape_cast %119 : vector<1xf32> to vector<1x1xf32>
    %c0_i32_30 = arith.constant 0 : i32
    %121 = vector.broadcast %c0_i32_30 : i32 to vector<1x128xi32>
    %122 = arith.cmpi eq, %13, %121 : vector<1x128xi32>
    %cst_31 = arith.constant 0.000000e+00 : f32
    %123 = vector.shape_cast %116 : vector<1x1xf32> to vector<1x1xf32>
    %124 = vector.broadcast %123 : vector<1x1xf32> to vector<1x128xf32>
    %125 = vector.broadcast %cst_31 : f32 to vector<1x128xf32>
    %126 = arith.select %122, %124, %125 : vector<1x128xi1>, vector<1x128xf32>
    %127 = arith.addf %91, %126 : vector<1x128xf32>
    %c0_i32_32 = arith.constant 0 : i32
    %128 = vector.broadcast %c0_i32_32 : i32 to vector<1x128xi32>
    %129 = arith.cmpi eq, %13, %128 : vector<1x128xi32>
    %cst_33 = arith.constant 0.000000e+00 : f32
    %130 = vector.shape_cast %120 : vector<1x1xf32> to vector<1x1xf32>
    %131 = vector.broadcast %130 : vector<1x1xf32> to vector<1x128xf32>
    %132 = vector.broadcast %cst_33 : f32 to vector<1x128xf32>
    %133 = arith.select %129, %131, %132 : vector<1x128xi1>, vector<1x128xf32>
    %134 = arith.addf %92, %133 : vector<1x128xf32>
    %135 = vector.extract_strided_slice %4 {offsets = [0, 1], sizes = [6, 1], strides = [1, 1]} : vector<6x5xi32> to vector<6x1xi32>
    %c-1_i32_34 = arith.constant -1 : i32
    %136 = vector.broadcast %c-1_i32_34 : i32 to vector<6x1xi32>
    %137 = arith.cmpi ne, %135, %136 : vector<6x1xi32>
    %138 = arith.andi %137, %11 : vector<6x1xi1>
    %cst_35 = arith.constant 0.000000e+00 : f32
    %139 = vector.broadcast %cst_35 : f32 to vector<6x29xf32>
    %140 = arith.select %27, %90, %139 : vector<6x29xi1>, vector<6x29xf32>
    %cst_36 = arith.constant dense<0.000000e+00> : vector<6xf32>
    %141 = vector.multi_reduction <add>, %140, %cst_36 [1] : vector<6x29xf32> to vector<6xf32>
    %142 = vector.shape_cast %141 : vector<6xf32> to vector<6x1xf32>
    %143 = math.log %142 : vector<6x1xf32>
    %144 = arith.addf %31, %143 : vector<6x1xf32>
    %c11_i32_37 = arith.constant 11 : i32
    %145 = vector.broadcast %c11_i32_37 : i32 to vector<6x1xi32>
    %146 = arith.addi %145, %135 : vector<6x1xi32>
    %147 = vector.broadcast %146 : vector<6x1xi32> to vector<6x29xi32>
    %148 = arith.cmpi eq, %12, %147 : vector<6x29xi32>
    %149 = arith.andi %27, %148 : vector<6x29xi1>
    %cst_38 = arith.constant 0.000000e+00 : f32
    %150 = vector.broadcast %cst_38 : f32 to vector<6x29xf32>
    %151 = arith.select %149, %3, %150 : vector<6x29xi1>, vector<6x29xf32>
    %cst_39 = arith.constant dense<0.000000e+00> : vector<6xf32>
    %152 = vector.multi_reduction <add>, %151, %cst_39 [1] : vector<6x29xf32> to vector<6xf32>
    %153 = vector.shape_cast %152 : vector<6xf32> to vector<6x1xf32>
    %154 = arith.subf %144, %153 : vector<6x1xf32>
    %cst_40 = arith.constant 0.000000e+00 : f32
    %155 = vector.broadcast %cst_40 : f32 to vector<6x1xf32>
    %156 = arith.select %138, %154, %155 : vector<6x1xi1>, vector<6x1xf32>
    %cst_41 = arith.constant dense<0.000000e+00> : vector<1xf32>
    %157 = vector.multi_reduction <add>, %156, %cst_41 [0] : vector<6x1xf32> to vector<1xf32>
    %158 = vector.shape_cast %157 : vector<1xf32> to vector<1x1xf32>
    %159 = arith.extui %138 : vector<6x1xi1> to vector<6x1xi32>
    %160 = arith.sitofp %159 : vector<6x1xi32> to vector<6x1xf32>
    %cst_42 = arith.constant dense<0.000000e+00> : vector<1xf32>
    %161 = vector.multi_reduction <add>, %160, %cst_42 [0] : vector<6x1xf32> to vector<1xf32>
    %162 = vector.shape_cast %161 : vector<1xf32> to vector<1x1xf32>
    %c1_i32 = arith.constant 1 : i32
    %163 = vector.broadcast %c1_i32 : i32 to vector<1x128xi32>
    %164 = arith.cmpi eq, %13, %163 : vector<1x128xi32>
    %cst_43 = arith.constant 0.000000e+00 : f32
    %165 = vector.shape_cast %158 : vector<1x1xf32> to vector<1x1xf32>
    %166 = vector.broadcast %165 : vector<1x1xf32> to vector<1x128xf32>
    %167 = vector.broadcast %cst_43 : f32 to vector<1x128xf32>
    %168 = arith.select %164, %166, %167 : vector<1x128xi1>, vector<1x128xf32>
    %169 = arith.addf %127, %168 : vector<1x128xf32>
    %c1_i32_44 = arith.constant 1 : i32
    %170 = vector.broadcast %c1_i32_44 : i32 to vector<1x128xi32>
    %171 = arith.cmpi eq, %13, %170 : vector<1x128xi32>
    %cst_45 = arith.constant 0.000000e+00 : f32
    %172 = vector.shape_cast %162 : vector<1x1xf32> to vector<1x1xf32>
    %173 = vector.broadcast %172 : vector<1x1xf32> to vector<1x128xf32>
    %174 = vector.broadcast %cst_45 : f32 to vector<1x128xf32>
    %175 = arith.select %171, %173, %174 : vector<1x128xi1>, vector<1x128xf32>
    %176 = arith.addf %134, %175 : vector<1x128xf32>
    %177 = vector.extract_strided_slice %4 {offsets = [0, 2], sizes = [6, 1], strides = [1, 1]} : vector<6x5xi32> to vector<6x1xi32>
    %c-1_i32_46 = arith.constant -1 : i32
    %178 = vector.broadcast %c-1_i32_46 : i32 to vector<6x1xi32>
    %179 = arith.cmpi ne, %177, %178 : vector<6x1xi32>
    %180 = arith.andi %179, %11 : vector<6x1xi1>
    %cst_47 = arith.constant 0.000000e+00 : f32
    %181 = vector.broadcast %cst_47 : f32 to vector<6x29xf32>
    %182 = arith.select %36, %76, %181 : vector<6x29xi1>, vector<6x29xf32>
    %cst_48 = arith.constant dense<0.000000e+00> : vector<6xf32>
    %183 = vector.multi_reduction <add>, %182, %cst_48 [1] : vector<6x29xf32> to vector<6xf32>
    %184 = vector.shape_cast %183 : vector<6xf32> to vector<6x1xf32>
    %185 = math.log %184 : vector<6x1xf32>
    %186 = arith.addf %40, %185 : vector<6x1xf32>
    %c22_i32_49 = arith.constant 22 : i32
    %187 = vector.broadcast %c22_i32_49 : i32 to vector<6x1xi32>
    %188 = arith.addi %187, %177 : vector<6x1xi32>
    %189 = vector.broadcast %188 : vector<6x1xi32> to vector<6x29xi32>
    %190 = arith.cmpi eq, %12, %189 : vector<6x29xi32>
    %191 = arith.andi %36, %190 : vector<6x29xi1>
    %cst_50 = arith.constant 0.000000e+00 : f32
    %192 = vector.broadcast %cst_50 : f32 to vector<6x29xf32>
    %193 = arith.select %191, %3, %192 : vector<6x29xi1>, vector<6x29xf32>
    %cst_51 = arith.constant dense<0.000000e+00> : vector<6xf32>
    %194 = vector.multi_reduction <add>, %193, %cst_51 [1] : vector<6x29xf32> to vector<6xf32>
    %195 = vector.shape_cast %194 : vector<6xf32> to vector<6x1xf32>
    %196 = arith.subf %186, %195 : vector<6x1xf32>
    %cst_52 = arith.constant 0.000000e+00 : f32
    %197 = vector.broadcast %cst_52 : f32 to vector<6x1xf32>
    %198 = arith.select %180, %196, %197 : vector<6x1xi1>, vector<6x1xf32>
    %cst_53 = arith.constant dense<0.000000e+00> : vector<1xf32>
    %199 = vector.multi_reduction <add>, %198, %cst_53 [0] : vector<6x1xf32> to vector<1xf32>
    %200 = vector.shape_cast %199 : vector<1xf32> to vector<1x1xf32>
    %201 = arith.extui %180 : vector<6x1xi1> to vector<6x1xi32>
    %202 = arith.sitofp %201 : vector<6x1xi32> to vector<6x1xf32>
    %cst_54 = arith.constant dense<0.000000e+00> : vector<1xf32>
    %203 = vector.multi_reduction <add>, %202, %cst_54 [0] : vector<6x1xf32> to vector<1xf32>
    %204 = vector.shape_cast %203 : vector<1xf32> to vector<1x1xf32>
    %c2_i32 = arith.constant 2 : i32
    %205 = vector.broadcast %c2_i32 : i32 to vector<1x128xi32>
    %206 = arith.cmpi eq, %13, %205 : vector<1x128xi32>
    %cst_55 = arith.constant 0.000000e+00 : f32
    %207 = vector.shape_cast %200 : vector<1x1xf32> to vector<1x1xf32>
    %208 = vector.broadcast %207 : vector<1x1xf32> to vector<1x128xf32>
    %209 = vector.broadcast %cst_55 : f32 to vector<1x128xf32>
    %210 = arith.select %206, %208, %209 : vector<1x128xi1>, vector<1x128xf32>
    %211 = arith.addf %169, %210 : vector<1x128xf32>
    %c2_i32_56 = arith.constant 2 : i32
    %212 = vector.broadcast %c2_i32_56 : i32 to vector<1x128xi32>
    %213 = arith.cmpi eq, %13, %212 : vector<1x128xi32>
    %cst_57 = arith.constant 0.000000e+00 : f32
    %214 = vector.shape_cast %204 : vector<1x1xf32> to vector<1x1xf32>
    %215 = vector.broadcast %214 : vector<1x1xf32> to vector<1x128xf32>
    %216 = vector.broadcast %cst_57 : f32 to vector<1x128xf32>
    %217 = arith.select %213, %215, %216 : vector<1x128xi1>, vector<1x128xf32>
    %218 = arith.addf %176, %217 : vector<1x128xf32>
    %219 = vector.extract_strided_slice %4 {offsets = [0, 3], sizes = [6, 1], strides = [1, 1]} : vector<6x5xi32> to vector<6x1xi32>
    %c-1_i32_58 = arith.constant -1 : i32
    %220 = vector.broadcast %c-1_i32_58 : i32 to vector<6x1xi32>
    %221 = arith.cmpi ne, %219, %220 : vector<6x1xi32>
    %222 = arith.andi %221, %11 : vector<6x1xi1>
    %cst_59 = arith.constant 0.000000e+00 : f32
    %223 = vector.broadcast %cst_59 : f32 to vector<6x29xf32>
    %224 = arith.select %45, %90, %223 : vector<6x29xi1>, vector<6x29xf32>
    %cst_60 = arith.constant dense<0.000000e+00> : vector<6xf32>
    %225 = vector.multi_reduction <add>, %224, %cst_60 [1] : vector<6x29xf32> to vector<6xf32>
    %226 = vector.shape_cast %225 : vector<6xf32> to vector<6x1xf32>
    %227 = math.log %226 : vector<6x1xf32>
    %228 = arith.addf %49, %227 : vector<6x1xf32>
    %c24_i32_61 = arith.constant 24 : i32
    %229 = vector.broadcast %c24_i32_61 : i32 to vector<6x1xi32>
    %230 = arith.addi %229, %219 : vector<6x1xi32>
    %231 = vector.broadcast %230 : vector<6x1xi32> to vector<6x29xi32>
    %232 = arith.cmpi eq, %12, %231 : vector<6x29xi32>
    %233 = arith.andi %45, %232 : vector<6x29xi1>
    %cst_62 = arith.constant 0.000000e+00 : f32
    %234 = vector.broadcast %cst_62 : f32 to vector<6x29xf32>
    %235 = arith.select %233, %3, %234 : vector<6x29xi1>, vector<6x29xf32>
    %cst_63 = arith.constant dense<0.000000e+00> : vector<6xf32>
    %236 = vector.multi_reduction <add>, %235, %cst_63 [1] : vector<6x29xf32> to vector<6xf32>
    %237 = vector.shape_cast %236 : vector<6xf32> to vector<6x1xf32>
    %238 = arith.subf %228, %237 : vector<6x1xf32>
    %cst_64 = arith.constant 0.000000e+00 : f32
    %239 = vector.broadcast %cst_64 : f32 to vector<6x1xf32>
    %240 = arith.select %222, %238, %239 : vector<6x1xi1>, vector<6x1xf32>
    %cst_65 = arith.constant dense<0.000000e+00> : vector<1xf32>
    %241 = vector.multi_reduction <add>, %240, %cst_65 [0] : vector<6x1xf32> to vector<1xf32>
    %242 = vector.shape_cast %241 : vector<1xf32> to vector<1x1xf32>
    %243 = arith.extui %222 : vector<6x1xi1> to vector<6x1xi32>
    %244 = arith.sitofp %243 : vector<6x1xi32> to vector<6x1xf32>
    %cst_66 = arith.constant dense<0.000000e+00> : vector<1xf32>
    %245 = vector.multi_reduction <add>, %244, %cst_66 [0] : vector<6x1xf32> to vector<1xf32>
    %246 = vector.shape_cast %245 : vector<1xf32> to vector<1x1xf32>
    %c3_i32 = arith.constant 3 : i32
    %247 = vector.broadcast %c3_i32 : i32 to vector<1x128xi32>
    %248 = arith.cmpi eq, %13, %247 : vector<1x128xi32>
    %cst_67 = arith.constant 0.000000e+00 : f32
    %249 = vector.shape_cast %242 : vector<1x1xf32> to vector<1x1xf32>
    %250 = vector.broadcast %249 : vector<1x1xf32> to vector<1x128xf32>
    %251 = vector.broadcast %cst_67 : f32 to vector<1x128xf32>
    %252 = arith.select %248, %250, %251 : vector<1x128xi1>, vector<1x128xf32>
    %253 = arith.addf %211, %252 : vector<1x128xf32>
    %c3_i32_68 = arith.constant 3 : i32
    %254 = vector.broadcast %c3_i32_68 : i32 to vector<1x128xi32>
    %255 = arith.cmpi eq, %13, %254 : vector<1x128xi32>
    %cst_69 = arith.constant 0.000000e+00 : f32
    %256 = vector.shape_cast %246 : vector<1x1xf32> to vector<1x1xf32>
    %257 = vector.broadcast %256 : vector<1x1xf32> to vector<1x128xf32>
    %258 = vector.broadcast %cst_69 : f32 to vector<1x128xf32>
    %259 = arith.select %255, %257, %258 : vector<1x128xi1>, vector<1x128xf32>
    %260 = arith.addf %218, %259 : vector<1x128xf32>
    %261 = vector.extract_strided_slice %4 {offsets = [0, 4], sizes = [6, 1], strides = [1, 1]} : vector<6x5xi32> to vector<6x1xi32>
    %c-1_i32_70 = arith.constant -1 : i32
    %262 = vector.broadcast %c-1_i32_70 : i32 to vector<6x1xi32>
    %263 = arith.cmpi ne, %261, %262 : vector<6x1xi32>
    %264 = arith.andi %263, %11 : vector<6x1xi1>
    %cst_71 = arith.constant 0.000000e+00 : f32
    %265 = vector.broadcast %cst_71 : f32 to vector<6x29xf32>
    %266 = arith.select %54, %76, %265 : vector<6x29xi1>, vector<6x29xf32>
    %cst_72 = arith.constant dense<0.000000e+00> : vector<6xf32>
    %267 = vector.multi_reduction <add>, %266, %cst_72 [1] : vector<6x29xf32> to vector<6xf32>
    %268 = vector.shape_cast %267 : vector<6xf32> to vector<6x1xf32>
    %269 = math.log %268 : vector<6x1xf32>
    %270 = arith.addf %58, %269 : vector<6x1xf32>
    %c26_i32_73 = arith.constant 26 : i32
    %271 = vector.broadcast %c26_i32_73 : i32 to vector<6x1xi32>
    %272 = arith.addi %271, %261 : vector<6x1xi32>
    %273 = vector.broadcast %272 : vector<6x1xi32> to vector<6x29xi32>
    %274 = arith.cmpi eq, %12, %273 : vector<6x29xi32>
    %275 = arith.andi %54, %274 : vector<6x29xi1>
    %cst_74 = arith.constant 0.000000e+00 : f32
    %276 = vector.broadcast %cst_74 : f32 to vector<6x29xf32>
    %277 = arith.select %275, %3, %276 : vector<6x29xi1>, vector<6x29xf32>
    %cst_75 = arith.constant dense<0.000000e+00> : vector<6xf32>
    %278 = vector.multi_reduction <add>, %277, %cst_75 [1] : vector<6x29xf32> to vector<6xf32>
    %279 = vector.shape_cast %278 : vector<6xf32> to vector<6x1xf32>
    %280 = arith.subf %270, %279 : vector<6x1xf32>
    %cst_76 = arith.constant 0.000000e+00 : f32
    %281 = vector.broadcast %cst_76 : f32 to vector<6x1xf32>
    %282 = arith.select %264, %280, %281 : vector<6x1xi1>, vector<6x1xf32>
    %cst_77 = arith.constant dense<0.000000e+00> : vector<1xf32>
    %283 = vector.multi_reduction <add>, %282, %cst_77 [0] : vector<6x1xf32> to vector<1xf32>
    %284 = vector.shape_cast %283 : vector<1xf32> to vector<1x1xf32>
    %285 = arith.extui %264 : vector<6x1xi1> to vector<6x1xi32>
    %286 = arith.sitofp %285 : vector<6x1xi32> to vector<6x1xf32>
    %cst_78 = arith.constant dense<0.000000e+00> : vector<1xf32>
    %287 = vector.multi_reduction <add>, %286, %cst_78 [0] : vector<6x1xf32> to vector<1xf32>
    %288 = vector.shape_cast %287 : vector<1xf32> to vector<1x1xf32>
    %c4_i32 = arith.constant 4 : i32
    %289 = vector.broadcast %c4_i32 : i32 to vector<1x128xi32>
    %290 = arith.cmpi eq, %13, %289 : vector<1x128xi32>
    %cst_79 = arith.constant 0.000000e+00 : f32
    %291 = vector.shape_cast %284 : vector<1x1xf32> to vector<1x1xf32>
    %292 = vector.broadcast %291 : vector<1x1xf32> to vector<1x128xf32>
    %293 = vector.broadcast %cst_79 : f32 to vector<1x128xf32>
    %294 = arith.select %290, %292, %293 : vector<1x128xi1>, vector<1x128xf32>
    %295 = arith.addf %253, %294 : vector<1x128xf32>
    %c4_i32_80 = arith.constant 4 : i32
    %296 = vector.broadcast %c4_i32_80 : i32 to vector<1x128xi32>
    %297 = arith.cmpi eq, %13, %296 : vector<1x128xi32>
    %cst_81 = arith.constant 0.000000e+00 : f32
    %298 = vector.shape_cast %288 : vector<1x1xf32> to vector<1x1xf32>
    %299 = vector.broadcast %298 : vector<1x1xf32> to vector<1x128xf32>
    %300 = vector.broadcast %cst_81 : f32 to vector<1x128xf32>
    %301 = arith.select %297, %299, %300 : vector<1x128xi1>, vector<1x128xf32>
    %302 = arith.addf %260, %301 : vector<1x128xf32>
    %c0_82 = arith.constant 0 : index
    %c0_83 = arith.constant 0 : index
    %303 = vector.load %arg4[%c0_82, %c0_83] : memref<1x128xf32, #tpu.memory_space<vmem>>, vector<1x128xf32>
    %304 = arith.addf %303, %295 : vector<1x128xf32>
    %c0_84 = arith.constant 0 : index
    %c0_85 = arith.constant 0 : index
    %305 = vector.load %arg4[%c0_84, %c0_85] : memref<1x128xf32, #tpu.memory_space<vmem>>, vector<1x128xf32>
    tpu.vector_store %arg4[%c0_84, %c0_85], %304 {strides = array<i32>} : memref<1x128xf32, #tpu.memory_space<vmem>>, vector<1x128xf32>,
    %c0_86 = arith.constant 0 : index
    %c0_87 = arith.constant 0 : index
    %306 = vector.load %arg5[%c0_86, %c0_87] : memref<1x128xf32, #tpu.memory_space<vmem>>, vector<1x128xf32>
    %307 = arith.addf %306, %302 : vector<1x128xf32>
    %c0_88 = arith.constant 0 : index
    %c0_89 = arith.constant 0 : index
    %308 = vector.load %arg5[%c0_88, %c0_89] : memref<1x128xf32, #tpu.memory_space<vmem>>, vector<1x128xf32>
    tpu.vector_store %arg5[%c0_88, %c0_89], %307 {strides = array<i32>} : memref<1x128xf32, #tpu.memory_space<vmem>>, vector<1x128xf32>,
    return
  }
  func.func @transform_0(%arg0: i32, %arg1: memref<1xi32, #tpu.memory_space<smem>>) -> (i32, i32) {
    %c0_i32 = arith.constant 0 : i32
    %c0_i32_0 = arith.constant 0 : i32
    return %arg0, %c0_i32 : i32, i32
  }
  func.func @transform_1(%arg0: i32, %arg1: memref<1xi32, #tpu.memory_space<smem>>) -> (i32, i32) {
    %c0_i32 = arith.constant 0 : i32
    %c0_i32_0 = arith.constant 0 : i32
    return %arg0, %c0_i32 : i32, i32
  }
  func.func @transform_2(%arg0: i32, %arg1: memref<1xi32, #tpu.memory_space<smem>>) -> (i32, i32) {
    %c0_i32 = arith.constant 0 : i32
    %c0_i32_0 = arith.constant 0 : i32
    %c0_i32_1 = arith.constant 0 : i32
    return %c0_i32, %c0_i32_0 : i32, i32
  }
  func.func @transform_3(%arg0: i32, %arg1: memref<1xi32, #tpu.memory_space<smem>>) -> (i32, i32) {
    %c0_i32 = arith.constant 0 : i32
    %c0_i32_0 = arith.constant 0 : i32
    %c0_i32_1 = arith.constant 0 : i32
    return %c0_i32, %c0_i32_0 : i32, i32
  }
}

</mosaic_0001>

<llo_original>
// kernel: tpu_custom_call.1
$region0: #{tpu_custom_call.1}
  #allocation0 [shape = 'u32[]', space=smem, size = 0x4, offset = 0x4, fixed_abs, tag = 'smem constant byte address 0x4 - core index']
  #allocation1 [shape = 'u32[72,128]{1,0:T(1,128)}', space=vmem, size = 0x9000, scoped, tag = 'internal scratch']
  #allocation2 [shape = 's32[1]{0}', space=sflag, size = 0x4, scoped, tag = 'scoped memory for tpu_custom_call.1']
  #allocation3 [shape = 's32[1]{0:T(128)S(6)}', space=smem, size = 0x200, scoped, tag = 'prefetched SMEM operand 0']
  %s0 = inlined_call_operand.<no memory space> [shape: s32[1], index: 0, kind: input, shape index: {}]
  %s1 = inlined_call_operand.hbm [shape: f32[6,29], index: 1, kind: input, shape index: {}]
  %s2 = inlined_call_operand.hbm [shape: s32[6,5], index: 2, kind: input, shape index: {}]
  %s3 = inlined_call_operand.hbm [shape: f32[1,128], index: 3, kind: output, shape index: {0}]
  %s4 = inlined_call_operand.hbm [shape: f32[1,128], index: 4, kind: output, shape index: {1}]
  %5 = xla_tuple %s3, %s4
  %s6 = sld [smem:[#allocation0]]
  $region38: #{tpu_custom_call.1} parent=0
    _
  %s8 = ssub.s32 1, %s6
  %s9 = scalar_select 0, %s8, %s6
  %10 = sst [smem:[#allocation3]] %s0
  $region1: #{tpu_custom_call.1} parent=0
    #allocation4 [shape = 'u8[4096]{0}', space=vmem, size = 0x1000, scoped, tag = 'input window, operand 1, single buffered']
    #allocation5 [shape = 's32[1]{0}', space=sflag, size = 0x4, scoped, tag = 'scoped memory for tpu_custom_call.1']
    #allocation6 [shape = 's32[1]{0}', space=sflag, size = 0x4, scoped, tag = 'scoped memory for tpu_custom_call.1']
    #allocation7 [shape = 'u8[4096]{0}', space=vmem, size = 0x1000, scoped, tag = 'input window, operand 2, single buffered']
    #allocation8 [shape = 's32[1]{0}', space=sflag, size = 0x4, scoped, tag = 'scoped memory for tpu_custom_call.1']
    #allocation9 [shape = 'u8[512]{0}', space=vmem, size = 0x400, scoped, tag = 'output window, operand 0, single buffered']
    #allocation10 [shape = 'u8[512]{0}', space=vmem, size = 0x400, scoped, tag = 'output window, operand 1, single buffered']
    #allocation11 [shape = 's32[1]{0}', space=sflag, size = 0x4, scoped, tag = 'scoped memory for tpu_custom_call.1']
    %11 = vsyncpa [#allocation5], 0
    %12 = vsyncpa [#allocation8], 0
    %13 = vsyncpa [#allocation6], 0
    %14 = vsyncpa [#allocation11], 0
    // Predicated region
    $region2: #{tpu_custom_call.1} parent=1 // pred_check
      _
    $region3: #{tpu_custom_call.1} parent=1 // pred_check_branch
      %16 = sbr.rel (0) target = $region5
    $region4: #{tpu_custom_call.1} parent=1 // pred_region
      %18 = vsyncadd [#allocation5], 0
      %s20 = sshll.u32 %s1, 4
      %s21 = int_to_ptr.hbm [resolvable:$true] %s20
      %s22 = sshll.u32 [#allocation4], 4
      %s23 = int_to_ptr.vmem [resolvable:$true] %s22
      %25 = dma.hbm_to_vmem [thread:$0]  %s21, 128, %s23, [#allocation5]
    $region5: #{tpu_custom_call.1} parent=1 // pred_fallthru
      _
    // Predicated region
    $region6: #{tpu_custom_call.1} parent=1 // pred_check
      _
    $region7: #{tpu_custom_call.1} parent=1 // pred_check_branch
      %27 = sbr.rel (0) target = $region9
    $region8: #{tpu_custom_call.1} parent=1 // pred_region
      %29 = vsyncadd [#allocation8], 0
      %s31 = sshll.u32 %s2, 4
      %s32 = int_to_ptr.hbm [resolvable:$true] %s31
      %s33 = sshll.u32 [#allocation7], 4
      %s34 = int_to_ptr.vmem [resolvable:$true] %s33
      %36 = dma.hbm_to_vmem [thread:$0]  %s32, 128, %s34, [#allocation8]
    $region9: #{tpu_custom_call.1} parent=1 // pred_fallthru
      _
    // Predicated region
    $region10: #{tpu_custom_call.1} parent=1 // pred_check
      _
    $region11: #{tpu_custom_call.1} parent=1 // pred_check_branch
      %38 = sbr.rel (0) target = $region13
    $region12: #{tpu_custom_call.1} parent=1 // pred_region
      %40 = dma.done [#allocation5], 128
    $region13: #{tpu_custom_call.1} parent=1 // pred_fallthru
      _
    // Predicated region
    $region14: #{tpu_custom_call.1} parent=1 // pred_check
      _
    $region15: #{tpu_custom_call.1} parent=1 // pred_check_branch
      %42 = sbr.rel (0) target = $region17
    $region16: #{tpu_custom_call.1} parent=1 // pred_region
      %44 = dma.done [#allocation8], 128
    $region17: #{tpu_custom_call.1} parent=1 // pred_fallthru
      _
    %p45 = scmp.eq.s32.totalorder 0, 0
    // Predicated region
    $region18: #{tpu_custom_call.1} parent=1 // pred_check
      %p46 = pneg %p45
    $region19: #{tpu_custom_call.1} parent=1 // pred_check_branch
      %48 = sbr.rel (%p46) target = $region21
    $region20: #{tpu_custom_call.1} parent=1 // pred_region
      %49 = vst [vmem:[#allocation9] sm:$0x1] 0.0
      %50 = vst [vmem:[#allocation10] sm:$0x1] 0.0
    $region21: #{tpu_custom_call.1} parent=1 // pred_fallthru
      _
    %v51 = vld [vmem:[#allocation4] sm:$0x3f]
    %v52 = vld [vmem:[#allocation7] sm:$0x3f]
    %v53 = vlaneseq
    %v54 = vshrl.u32 %v53, 7
    %s55 = smul.u32 0, 6
    %v56 = vstv %s55
    %v57 = vadd.s32 %v56, %v54
    %s58 = sld [smem:[#allocation3]]
    %v59 = vstv %s58
    %vm60 = vcmp.lt.s32.totalorder %v57, %v59
    %v61 = vlaneseq
    %v62 = vand.u32 %v61, 127
    %vm63 = vcmp.ge.s32.totalorder %v62, 0
    %vm64 = vcmp.lt.s32.totalorder %v62, 12
    %vm65 = vmand %vm63, %vm64
    %v66 = vsel %vm65, %v51, -1e+30
    %vm67 = vcmask 234496
    %v68 = vsel %vm67, %v66, -inf
    %69 = vmax.xlane.f32.xlu0 %v68
    %v70 = vpop.xlane.xlu0 %69
    %vm71 = vcmp.ge.s32.totalorder %v62, 11
    %vm72 = vcmp.lt.s32.totalorder %v62, 23
    %vm73 = vmand %vm71, %vm72
    %v74 = vsel %vm73, %v51, -1e+30
    %v75 = vsel %vm67, %v74, -inf
    %76 = vmax.xlane.f32.xlu0 %v75
    %v77 = vpop.xlane.xlu0 %76
    %vm78 = vcmp.ge.s32.totalorder %v62, 22
    %vm79 = vcmp.lt.s32.totalorder %v62, 25
    %vm80 = vmand %vm78, %vm79
    %v81 = vsel %vm80, %v51, -1e+30
    %v82 = vsel %vm67, %v81, -inf
    %83 = vmax.xlane.f32.xlu0 %v82
    %v84 = vpop.xlane.xlu0 %83
    %vm85 = vcmp.ge.s32.totalorder %v62, 24
    %vm86 = vcmp.lt.s32.totalorder %v62, 27
    %vm87 = vmand %vm85, %vm86
    %v88 = vsel %vm87, %v51, -1e+30
    %v89 = vsel %vm67, %v88, -inf
    %90 = vmax.xlane.f32.xlu0 %v89
    %v91 = vpop.xlane.xlu0 %90
    %vm92 = vcmp.ge.s32.totalorder %v62, 26
    %vm93 = vcmp.lt.s32.totalorder %v62, 29
    %vm94 = vmand %vm92, %vm93
    %v95 = vsel %vm94, %v51, -1e+30
    %v96 = vsel %vm67, %v95, -inf
    %97 = vmax.xlane.f32.xlu0 %v96
    %v98 = vpop.xlane.xlu0 %97
    %v99 = vsel %vm65, %v70, 0.0
    %v100 = vsel %vm80, %v84, %v99
    %vm101 = vmor %vm65, %vm80
    %v102 = vsel %vm94, %v98, %v100
    %vm103 = vmor %vm101, %vm94
    %v104 = vsub.f32 %v51, %v102
    %v105 = vsel %vm103, %v104, -1e+30
    %v106 = vmul.f32 %v105, 1.442695
    %v107 = vpow.pop %v106
    %v108 = vsel %vm73, %v77, 0.0
    %v109 = vsel %vm87, %v91, %v108
    %vm110 = vmor %vm73, %vm87
    %v111 = vsub.f32 %v51, %v109
    %v112 = vsel %vm110, %v111, -1e+30
    %v113 = vmul.f32 %v112, 1.442695
    %v114 = vpow.pop %v113
    %vm115 = vcmp.ne.s32.totalorder %v52, 4294967295
    %vm116 = vmand %vm115, %vm60
    %v117 = vsel %vm65, %v107, 0.0
    %v118 = vsel %vm67, %v117, 0.0
    %119 = vadd.xlane.f32.xlu0 %v118
    %v120 = vpop.xlane.xlu0 %119
    %v121 = vlog2.pop %v120
    %v122 = vmul.f32 %v121, 0.6931472
    %v123 = vadd.f32 %v70, %v122
    %124 = vset.pattern.permute.xlu0 0
    %125 = vperm.xlu0 %124, %v52
    %v126 = vpop.permute.xlu0 %125
    %vm127 = vcmp.eq.s32.totalorder %v62, %v126
    %vm128 = vmand %vm65, %vm127
    %v129 = vsel %vm128, %v51, 0.0
    %v130 = vsel %vm67, %v129, 0.0
    %131 = vadd.xlane.f32.xlu0 %v130
    %v132 = vpop.xlane.xlu0 %131
    %v133 = vsub.f32 %v123, %v132
    %v134 = vsel %vm116, %v133, 0.0
    %vm135 = vcmask 5120
    %v136 = vsel %vm135, %v134, 0.0
    %v137 = vrot.slane %v136, 4
    %v138 = vadd.f32 %v136, %v137
    %v139 = vrot.slane %v138, 2
    %v140 = vadd.f32 %v138, %v139
    %v141 = vrot.slane %v140, 1
    %v142 = vadd.f32 %v140, %v141
    %v143 = vsel %vm116, 1, 0
    %v144 = vcvt.s32.f32 %v143
    %v145 = vsel %vm135, %v144, 0.0
    %v146 = vrot.slane %v145, 4
    %v147 = vadd.f32 %v145, %v146
    %v148 = vrot.slane %v147, 2
    %v149 = vadd.f32 %v147, %v148
    %v150 = vrot.slane %v149, 1
    %v151 = vadd.f32 %v149, %v150
    %vm152 = vcmp.eq.s32.totalorder %v62, 0
    %154 = vset.pattern.permute.xlu0 0
    %155 = vperm.xlu0 %154, %v142
    %v156 = vpop.permute.xlu0 %155
    %v158 = vsel %vm152, %v156, 0.0
    %v159 = vadd.f32 %v158, 0.0
    %161 = vset.pattern.permute.xlu0 0
    %162 = vperm.xlu0 %161, %v151
    %v163 = vpop.permute.xlu0 %162
    %v165 = vsel %vm152, %v163, 0.0
    %v166 = vadd.f32 %v165, 0.0
    %v167 = vsel %vm73, %v114, 0.0
    %v168 = vsel %vm67, %v167, 0.0
    %169 = vadd.xlane.f32.xlu0 %v168
    %v170 = vpop.xlane.xlu0 %169
    %v171 = vlog2.pop %v170
    %v172 = vmul.f32 %v171, 0.6931472
    %v173 = vadd.f32 %v77, %v172
    %v174 = vadd.s32 %v52, 11
    %175 = vset.pattern.permute.xlu0 1
    %176 = vperm.xlu0 %175, %v174
    %v177 = vpop.permute.xlu0 %176
    %vm178 = vcmp.eq.s32.totalorder %v62, %v177
    %vm179 = vmand %vm73, %vm178
    %v180 = vsel %vm179, %v51, 0.0
    %v181 = vsel %vm67, %v180, 0.0
    %182 = vadd.xlane.f32.xlu0 %v181
    %v183 = vpop.xlane.xlu0 %182
    %v184 = vsub.f32 %v173, %v183
    %v185 = vsel %vm116, %v184, 0.0
    %vm186 = vcmask 13320
    %v187 = vsel %vm186, %v185, 0.0
    %v188 = vrot.slane %v187, 4
    %v189 = vadd.f32 %v187, %v188
    %v190 = vrot.slane %v189, 2
    %v191 = vadd.f32 %v189, %v190
    %v192 = vrot.slane %v191, 1
    %v193 = vadd.f32 %v191, %v192
    %v194 = vsel %vm186, %v144, 0.0
    %v195 = vrot.slane %v194, 4
    %v196 = vadd.f32 %v194, %v195
    %v197 = vrot.slane %v196, 2
    %v198 = vadd.f32 %v196, %v197
    %v199 = vrot.slane %v198, 1
    %v200 = vadd.f32 %v198, %v199
    %vm201 = vcmp.eq.s32.totalorder %v62, 1
    %203 = vset.pattern.permute.xlu0 1
    %204 = vperm.xlu0 %203, %v193
    %v205 = vpop.permute.xlu0 %204
    %v207 = vsel %vm201, %v205, 0.0
    %v208 = vadd.f32 %v159, %v207
    %210 = vset.pattern.permute.xlu0 1
    %211 = vperm.xlu0 %210, %v200
    %v212 = vpop.permute.xlu0 %211
    %v214 = vsel %vm201, %v212, 0.0
    %v215 = vadd.f32 %v166, %v214
    %v216 = vsel %vm80, %v107, 0.0
    %v217 = vsel %vm67, %v216, 0.0
    %218 = vadd.xlane.f32.xlu0 %v217
    %v219 = vpop.xlane.xlu0 %218
    %v220 = vlog2.pop %v219
    %v221 = vmul.f32 %v220, 0.6931472
    %v222 = vadd.f32 %v84, %v221
    %v223 = vadd.s32 %v52, 22
    %224 = vset.pattern.permute.xlu0 2
    %225 = vperm.xlu0 %224, %v223
    %v226 = vpop.permute.xlu0 %225
    %vm227 = vcmp.eq.s32.totalorder %v62, %v226
    %vm228 = vmand %vm80, %vm227
    %v229 = vsel %vm228, %v51, 0.0
    %v230 = vsel %vm67, %v229, 0.0
    %231 = vadd.xlane.f32.xlu0 %v230
    %v232 = vpop.xlane.xlu0 %231
    %v233 = vsub.f32 %v222, %v232
    %v234 = vsel %vm116, %v233, 0.0
    %vm235 = vcmask 21520
    %v236 = vsel %vm235, %v234, 0.0
    %v237 = vrot.slane %v236, 4
    %v238 = vadd.f32 %v236, %v237
    %v239 = vrot.slane %v238, 2
    %v240 = vadd.f32 %v238, %v239
    %v241 = vrot.slane %v240, 1
    %v242 = vadd.f32 %v240, %v241
    %v243 = vsel %vm235, %v144, 0.0
    %v244 = vrot.slane %v243, 4
    %v245 = vadd.f32 %v243, %v244
    %v246 = vrot.slane %v245, 2
    %v247 = vadd.f32 %v245, %v246
    %v248 = vrot.slane %v247, 1
    %v249 = vadd.f32 %v247, %v248
    %vm250 = vcmp.eq.s32.totalorder %v62, 2
    %252 = vset.pattern.permute.xlu0 2
    %253 = vperm.xlu0 %252, %v242
    %v254 = vpop.permute.xlu0 %253
    %v256 = vsel %vm250, %v254, 0.0
    %v257 = vadd.f32 %v208, %v256
    %259 = vset.pattern.permute.xlu0 2
    %260 = vperm.xlu0 %259, %v249
    %v261 = vpop.permute.xlu0 %260
    %v263 = vsel %vm250, %v261, 0.0
    %v264 = vadd.f32 %v215, %v263
    %v265 = vsel %vm87, %v114, 0.0
    %v266 = vsel %vm67, %v265, 0.0
    %267 = vadd.xlane.f32.xlu0 %v266
    %v268 = vpop.xlane.xlu0 %267
    %v269 = vlog2.pop %v268
    %v270 = vmul.f32 %v269, 0.6931472
    %v271 = vadd.f32 %v91, %v270
    %v272 = vadd.s32 %v52, 24
    %273 = vset.pattern.permute.xlu0 3
    %274 = vperm.xlu0 %273, %v272
    %v275 = vpop.permute.xlu0 %274
    %vm276 = vcmp.eq.s32.totalorder %v62, %v275
    %vm277 = vmand %vm87, %vm276
    %v278 = vsel %vm277, %v51, 0.0
    %v279 = vsel %vm67, %v278, 0.0
    %280 = vadd.xlane.f32.xlu0 %v279
    %v281 = vpop.xlane.xlu0 %280
    %v282 = vsub.f32 %v271, %v281
    %v283 = vsel %vm116, %v282, 0.0
    %vm284 = vcmask 29720
    %v285 = vsel %vm284, %v283, 0.0
    %v286 = vrot.slane %v285, 4
    %v287 = vadd.f32 %v285, %v286
    %v288 = vrot.slane %v287, 2
    %v289 = vadd.f32 %v287, %v288
    %v290 = vrot.slane %v289, 1
    %v291 = vadd.f32 %v289, %v290
    %v292 = vsel %vm284, %v144, 0.0
    %v293 = vrot.slane %v292, 4
    %v294 = vadd.f32 %v292, %v293
    %v295 = vrot.slane %v294, 2
    %v296 = vadd.f32 %v294, %v295
    %v297 = vrot.slane %v296, 1
    %v298 = vadd.f32 %v296, %v297
    %vm299 = vcmp.eq.s32.totalorder %v62, 3
    %301 = vset.pattern.permute.xlu0 3
    %302 = vperm.xlu0 %301, %v291
    %v303 = vpop.permute.xlu0 %302
    %v305 = vsel %vm299, %v303, 0.0
    %v306 = vadd.f32 %v257, %v305
    %308 = vset.pattern.permute.xlu0 3
    %309 = vperm.xlu0 %308, %v298
    %v310 = vpop.permute.xlu0 %309
    %v312 = vsel %vm299, %v310, 0.0
    %v313 = vadd.f32 %v264, %v312
    %v314 = vsel %vm94, %v107, 0.0
    %v315 = vsel %vm67, %v314, 0.0
    %316 = vadd.xlane.f32.xlu0 %v315
    %v317 = vpop.xlane.xlu0 %316
    %v318 = vlog2.pop %v317
    %v319 = vmul.f32 %v318, 0.6931472
    %v320 = vadd.f32 %v98, %v319
    %v321 = vadd.s32 %v52, 26
    %322 = vset.pattern.permute.xlu0 4
    %323 = vperm.xlu0 %322, %v321
    %v324 = vpop.permute.xlu0 %323
    %vm325 = vcmp.eq.s32.totalorder %v62, %v324
    %vm326 = vmand %vm94, %vm325
    %v327 = vsel %vm326, %v51, 0.0
    %v328 = vsel %vm67, %v327, 0.0
    %329 = vadd.xlane.f32.xlu0 %v328
    %v330 = vpop.xlane.xlu0 %329
    %v331 = vsub.f32 %v320, %v330
    %v332 = vsel %vm116, %v331, 0.0
    %vm333 = vcmask 37920
    %v334 = vsel %vm333, %v332, 0.0
    %v335 = vrot.slane %v334, 4
    %v336 = vadd.f32 %v334, %v335
    %v337 = vrot.slane %v336, 2
    %v338 = vadd.f32 %v336, %v337
    %v339 = vrot.slane %v338, 1
    %v340 = vadd.f32 %v338, %v339
    %v341 = vsel %vm333, %v144, 0.0
    %v342 = vrot.slane %v341, 4
    %v343 = vadd.f32 %v341, %v342
    %v344 = vrot.slane %v343, 2
    %v345 = vadd.f32 %v343, %v344
    %v346 = vrot.slane %v345, 1
    %v347 = vadd.f32 %v345, %v346
    %vm348 = vcmp.eq.s32.totalorder %v62, 4
    %350 = vset.pattern.permute.xlu0 4
    %351 = vperm.xlu0 %350, %v340
    %v352 = vpop.permute.xlu0 %351
    %v354 = vsel %vm348, %v352, 0.0
    %v355 = vadd.f32 %v306, %v354
    %357 = vset.pattern.permute.xlu0 4
    %358 = vperm.xlu0 %357, %v347
    %v359 = vpop.permute.xlu0 %358
    %v361 = vsel %vm348, %v359, 0.0
    %v362 = vadd.f32 %v313, %v361
    %v363 = vld [vmem:[#allocation9] sm:$0x1]
    %v364 = vadd.f32 %v363, %v355
    %365 = vst [vmem:[#allocation9] sm:$0x1] %v364
    %v366 = vld [vmem:[#allocation10] sm:$0x1]
    %v367 = vadd.f32 %v366, %v362
    %368 = vst [vmem:[#allocation10] sm:$0x1] %v367
    // Predicated region
    $region22: #{tpu_custom_call.1} parent=1 // pred_check
      _
    $region23: #{tpu_custom_call.1} parent=1 // pred_check_branch
      %370 = sbr.rel (0) target = $region25
    $region24: #{tpu_custom_call.1} parent=1 // pred_region
      %372 = vsyncadd [#allocation6], 0
      %s374 = sshll.u32 [#allocation9], 4
      %s375 = int_to_ptr.vmem [resolvable:$true] %s374
      %s376 = sshll.u32 %s3, 4
      %s377 = int_to_ptr.hbm [resolvable:$true] %s376
      %379 = dma.vmem_to_hbm [thread:$0]  %s375, 16, %s377, [#allocation6]
    $region25: #{tpu_custom_call.1} parent=1 // pred_fallthru
      _
    // Predicated region
    $region26: #{tpu_custom_call.1} parent=1 // pred_check
      _
    $region27: #{tpu_custom_call.1} parent=1 // pred_check_branch
      %381 = sbr.rel (0) target = $region29
    $region28: #{tpu_custom_call.1} parent=1 // pred_region
      %383 = vsyncadd [#allocation11], 0
      %s385 = sshll.u32 [#allocation10], 4
      %s386 = int_to_ptr.vmem [resolvable:$true] %s385
      %s387 = sshll.u32 %s4, 4
      %s388 = int_to_ptr.hbm [resolvable:$true] %s387
      %390 = dma.vmem_to_hbm [thread:$0]  %s386, 16, %s388, [#allocation11]
    $region29: #{tpu_custom_call.1} parent=1 // pred_fallthru
      _
    // Predicated region
    $region30: #{tpu_custom_call.1} parent=1 // pred_check
      _
    $region31: #{tpu_custom_call.1} parent=1 // pred_check_branch
      %392 = sbr.rel (0) target = $region33
    $region32: #{tpu_custom_call.1} parent=1 // pred_region
      %394 = dma.done [#allocation6], 16
    $region33: #{tpu_custom_call.1} parent=1 // pred_fallthru
      _
    // Predicated region
    $region34: #{tpu_custom_call.1} parent=1 // pred_check
      _
    $region35: #{tpu_custom_call.1} parent=1 // pred_check_branch
      %396 = sbr.rel (0) target = $region37
    $region36: #{tpu_custom_call.1} parent=1 // pred_region
      %398 = dma.done [#allocation11], 16
    $region37: #{tpu_custom_call.1} parent=1 // pred_fallthru
      _
    %399 = vsyncpa [#allocation5], 1
    %400 = vsyncpa [#allocation8], 1
    %401 = vsyncpa [#allocation6], 1
    %402 = vsyncpa [#allocation11], 1

</llo_original>
